<compile_context>
chip_gen: v6e
topology: v6e:2x2x1
jax: 0.10.0
libtpu: 0.0.40
codegen_flags: <defaults>
</compile_context>

<pallas_src>
import jax
import jax.numpy as jnp
from jax.experimental import pallas as pl
from jax.experimental.pallas import tpu as pltpu

_LANE = 128      # lane width (last dim)
_SUBLANE = 8     # sublane width (second-to-last dim)


def _round_up(n, m):
    return ((n + m - 1) // m) * m


def _actor_kernel(scale_ref, x_ref, w1_ref, b1_ref, w2_ref, b2_ref,
                  w3_ref, b3_ref, o_ref):
    """One batch-tile of the fused 3-layer MLP.

    x_ref : (TB, state_dim) f32 (unpadded; cast to bf16 here).
    w1    : (state_dim, H1p) bf16   b1: (1, H1p) f32
    w2    : (H1p, H2p)      bf16    b2: (1, H2p) f32
    w3    : (H2p, action_dim) bf16  b3: (1, action_dim) f32
    o_ref : (TB, action_dim) f32.   scale_ref: SMEM f32[1] (max_action).
    """
    scale = scale_ref[0]

    # Layer 1: bf16 MXU matmul, f32 accumulate + bias + ReLU, bf16 activation.
    x = x_ref[...].astype(jnp.bfloat16)
    h1 = jnp.dot(x, w1_ref[...], preferred_element_type=jnp.float32)
    h1 = jnp.maximum(h1 + b1_ref[...], 0.0).astype(jnp.bfloat16)

    # Layer 2: Linear + ReLU.
    h2 = jnp.dot(h1, w2_ref[...], preferred_element_type=jnp.float32)
    h2 = jnp.maximum(h2 + b2_ref[...], 0.0).astype(jnp.bfloat16)

    # Layer 3: narrow-N matmul straight to the real action lanes, tanh (EUP),
    # scaled by max_action, stored as f32.
    h3 = jnp.dot(h2, w3_ref[...], preferred_element_type=jnp.float32)
    o_ref[...] = (scale * jnp.tanh(h3 + b3_ref[...])).astype(o_ref.dtype)


def init_actor_params(key, state_dim, action_dim, nn_dim):
    """Deterministic init matching PyTorch nn.Linear defaults.

    Weights stored pre-transposed as (in, out) f32; biases as (1, out) f32.
    """
    k1, k2, k3, k4, k5, k6 = jax.random.split(key, 6)

    def linear(kw, kb, fan_in, fan_out):
        bound = 1.0 / jnp.sqrt(jnp.float32(fan_in))
        w = jax.random.uniform(kw, (fan_in, fan_out), jnp.float32, -bound, bound)
        b = jax.random.uniform(kb, (1, fan_out), jnp.float32, -bound, bound)
        return w, b

    w1, b1 = linear(k1, k2, state_dim, nn_dim[0])
    w2, b2 = linear(k3, k4, nn_dim[0], nn_dim[1])
    w3, b3 = linear(k5, k6, nn_dim[1], action_dim)
    return dict(w1=w1, b1=b1, w2=w2, b2=b2, w3=w3, b3=b3)


def prepare_actor_params(params):
    """One-time prep: pad only hidden feature dims to 128 lanes, cast to bf16.

    The state (input) dim and action (output) dim are left at their real
    sizes — full-array-dim blocks are legal and save HBM bytes.  Biases stay
    f32 (added to the f32 accumulator).
    """
    state_dim, h1 = params["w1"].shape
    h2 = params["w2"].shape[1]
    action_dim = params["w3"].shape[1]
    h1p = _round_up(h1, _LANE)
    h2p = _round_up(h2, _LANE)

    def pad_to(a, shape):
        return jnp.pad(a, [(0, t - s) for s, t in zip(a.shape, shape)])

    return dict(
        w1=pad_to(params["w1"], (state_dim, h1p)).astype(jnp.bfloat16),
        b1=pad_to(params["b1"].reshape(1, h1), (1, h1p)).astype(jnp.float32),
        w2=pad_to(params["w2"], (h1p, h2p)).astype(jnp.bfloat16),
        b2=pad_to(params["b2"].reshape(1, h2), (1, h2p)).astype(jnp.float32),
        w3=pad_to(params["w3"], (h2p, action_dim)).astype(jnp.bfloat16),
        b3=params["b3"].reshape(1, action_dim).astype(jnp.float32),
    )


def actor_forward(x, padded_params, max_action, *, tile_batch=1024,
                  use_pallas=None):
    """x: (batch, state_dim) f32.  padded_params: output of prepare_actor_params."""
    w1, b1 = padded_params["w1"], padded_params["b1"]
    w2, b2 = padded_params["w2"], padded_params["b2"]
    w3, b3 = padded_params["w3"], padded_params["b3"]

    batch, state_dim = x.shape
    assert state_dim == w1.shape[0]
    h1p = w1.shape[1]
    h2p = w2.shape[1]
    action_dim = w3.shape[1]

    if use_pallas is None:
        use_pallas = batch >= 128
    if not use_pallas:
        # Tiny-batch path (e.g. single-env action selection): one grid step
        # dominated by launch + weight-DMA latency; a fused XLA dot-chain is
        # as fast with zero maintenance cost.
        h = jnp.maximum(
            jnp.dot(x.astype(jnp.bfloat16), w1,
                    preferred_element_type=jnp.float32) + b1, 0.0)
        h = jnp.maximum(
            jnp.dot(h.astype(jnp.bfloat16), w2,
                    preferred_element_type=jnp.float32) + b2, 0.0)
        h = jnp.dot(h.astype(jnp.bfloat16), w3,
                    preferred_element_type=jnp.float32) + b3
        return jnp.float32(max_action) * jnp.tanh(h)

    # Batch tile: multiple of 8 sublanes, capped at tile_batch rows.
    tb = min(_round_up(batch, _SUBLANE), tile_batch)
    # v7x has 2 TensorCores: keep >=2 "parallel" grid steps when each still
    # gets a few hundred rows (neutral on single-TC v5e/v6e).
    if pl.cdiv(batch, tb) < 2 and batch >= 512:
        tb = _round_up(pl.cdiv(batch, 2), _SUBLANE)
    grid = (pl.cdiv(batch, tb),)
    # If batch % tb != 0, the last step reads rows past the end of x; each
    # output row depends only on its own input row and out-of-bounds stores
    # are clipped, so valid rows are unaffected (tanh keeps junk rows finite).

    scale = jnp.asarray([max_action], dtype=jnp.float32)

    def resident(arr):
        # Block index never changes -> stays VMEM-resident across grid steps.
        return pl.BlockSpec(arr.shape, lambda i: (0, 0))

    flops = 2 * batch * (state_dim * h1p + h1p * h2p + h2p * action_dim)
    bytes_accessed = (
        x.size * x.dtype.itemsize
        + sum(p.size * p.dtype.itemsize for p in (w1, b1, w2, b2, w3, b3))
        + batch * action_dim * 4
    )

    out = pl.pallas_call(
        _actor_kernel,
        out_shape=jax.ShapeDtypeStruct((batch, action_dim), jnp.float32),
        grid=grid,
        in_specs=[
            pl.BlockSpec(memory_space=pltpu.MemorySpace.SMEM),   # max_action
            pl.BlockSpec((tb, state_dim), lambda i: (i, 0)),     # x tile
            resident(w1), resident(b1),
            resident(w2), resident(b2),
            resident(w3), resident(b3),
        ],
        out_specs=pl.BlockSpec((tb, action_dim), lambda i: (i, 0)),
        compiler_params=pltpu.CompilerParams(
            dimension_semantics=("parallel",),
        ),
        cost_estimate=pl.CostEstimate(
            flops=flops,
            transcendentals=batch * action_dim,
            bytes_accessed=bytes_accessed,
        ),
    )(scale, x, w1, b1, w2, b2, w3, b3)

    return out


def _reference(x, raw_params, max_action):
    h = jnp.maximum(x @ raw_params["w1"] + raw_params["b1"], 0.0)
    h = jnp.maximum(h @ raw_params["w2"] + raw_params["b2"], 0.0)
    return max_action * jnp.tanh(h @ raw_params["w3"] + raw_params["b3"])


if __name__ == "__main__":
    # Small shapes consistent with the module's forward pass.
    state_dim, action_dim = 16, 8
    nn_dim = (64, 32)
    max_action = 2.0

    key = jax.random.PRNGKey(0)
    k_params, k_x1, k_x2 = jax.random.split(key, 3)
    raw_params = init_actor_params(k_params, state_dim, action_dim, nn_dim)
    padded_params = prepare_actor_params(raw_params)

    # Test 1: tiny batch, single grid step (force the Pallas path).
    x1 = jax.random.normal(k_x1, (8, state_dim), jnp.float32)
    out1 = jax.block_until_ready(
        actor_forward(x1, padded_params, max_action, use_pallas=True))
    ref1 = _reference(x1, raw_params, max_action)
    assert out1.shape == (8, action_dim)
    assert jnp.allclose(out1, ref1, atol=5e-2, rtol=5e-2), (
        f"max abs err {jnp.max(jnp.abs(out1 - ref1))}")

    # Test 2: multi-step grid with a ragged final tile.
    x2 = jax.random.normal(k_x2, (300, state_dim), jnp.float32)
    out2 = jax.block_until_ready(
        actor_forward(x2, padded_params, max_action, tile_batch=128,
                      use_pallas=True))
    ref2 = _reference(x2, raw_params, max_action)
    assert out2.shape == (300, action_dim)
    assert jnp.allclose(out2, ref2, atol=5e-2, rtol=5e-2), (
        f"max abs err {jnp.max(jnp.abs(out2 - ref2))}")

    print("KERNEL_OK")
</pallas_src>

<mosaic_0001>
module attributes {stable_mosaic.version = 11 : i64} {
  func.func @_actor_kernel(%arg0: i32, %arg1: memref<1xf32, #tpu.memory_space<smem>>, %arg2: memref<8x16xf32, #tpu.memory_space<vmem>>, %arg3: memref<16x128xbf16, #tpu.memory_space<vmem>>, %arg4: memref<1x128xf32, #tpu.memory_space<vmem>>, %arg5: memref<128x128xbf16, #tpu.memory_space<vmem>>, %arg6: memref<1x128xf32, #tpu.memory_space<vmem>>, %arg7: memref<128x8xbf16, #tpu.memory_space<vmem>>, %arg8: memref<1x8xf32, #tpu.memory_space<vmem>>, %arg9: memref<8x8xf32, #tpu.memory_space<vmem>>) attributes {dimension_semantics = [#tpu.dimension_semantics<parallel>], iteration_bounds = array<i64: 1>, scalar_prefetch = 0 : i64, scratch_operands = 0 : i64, tpu.core_type = #tpu.core_type<tc>, window_params = [{transform_indices = @transform_0, window_bounds = array<i64: 1>}, {transform_indices = @transform_1, window_bounds = array<i64: 8, 16>}, {pipeline_mode = #tpu.pipeline_mode<synchronous>, transform_indices = @transform_2, window_bounds = array<i64: 16, 128>}, {pipeline_mode = #tpu.pipeline_mode<synchronous>, transform_indices = @transform_3, window_bounds = array<i64: 1, 128>}, {pipeline_mode = #tpu.pipeline_mode<synchronous>, transform_indices = @transform_4, window_bounds = array<i64: 128, 128>}, {pipeline_mode = #tpu.pipeline_mode<synchronous>, transform_indices = @transform_5, window_bounds = array<i64: 1, 128>}, {pipeline_mode = #tpu.pipeline_mode<synchronous>, transform_indices = @transform_6, window_bounds = array<i64: 128, 8>}, {pipeline_mode = #tpu.pipeline_mode<synchronous>, transform_indices = @transform_7, window_bounds = array<i64: 1, 8>}, {transform_indices = @transform_8, window_bounds = array<i64: 8, 8>}]} {
    %c0 = arith.constant 0 : index
    %0 = memref.load %arg1[%c0] : memref<1xf32, #tpu.memory_space<smem>>
    %c0_0 = arith.constant 0 : index
    %c0_1 = arith.constant 0 : index
    %1 = vector.load %arg2[%c0_0, %c0_1] : memref<8x16xf32, #tpu.memory_space<vmem>>, vector<8x16xf32>
    %2 = arith.truncf %1 : vector<8x16xf32> to vector<8x16xbf16>
    %c0_2 = arith.constant 0 : index
    %c0_3 = arith.constant 0 : index
    %3 = vector.load %arg3[%c0_2, %c0_3] : memref<16x128xbf16, #tpu.memory_space<vmem>>, vector<16x128xbf16>
    %cst = arith.constant dense<0.000000e+00> : vector<8x128xf32>
    %4 = tpu.matmul %2, %3, %cst {dimension_numbers = #tpu.dot_dimension_numbers<[1], [0], [0], [1], [0, 0, 1, 1], [], []>} : vector<8x16xbf16>, vector<16x128xbf16>, vector<8x128xf32> -> vector<8x128xf32>
    %c0_4 = arith.constant 0 : index
    %c0_5 = arith.constant 0 : index
    %5 = vector.load %arg4[%c0_4, %c0_5] : memref<1x128xf32, #tpu.memory_space<vmem>>, vector<1x128xf32>
    %6 = vector.broadcast %5 : vector<1x128xf32> to vector<8x128xf32>
    %7 = arith.addf %4, %6 : vector<8x128xf32>
    %cst_6 = arith.constant 0.000000e+00 : f32
    %8 = vector.broadcast %cst_6 : f32 to vector<8x128xf32>
    %9 = arith.maximumf %7, %8 : vector<8x128xf32>
    %10 = arith.truncf %9 : vector<8x128xf32> to vector<8x128xbf16>
    %c0_7 = arith.constant 0 : index
    %c0_8 = arith.constant 0 : index
    %11 = vector.load %arg5[%c0_7, %c0_8] : memref<128x128xbf16, #tpu.memory_space<vmem>>, vector<128x128xbf16>
    %cst_9 = arith.constant dense<0.000000e+00> : vector<8x128xf32>
    %12 = tpu.matmul %10, %11, %cst_9 {dimension_numbers = #tpu.dot_dimension_numbers<[1], [0], [0], [1], [0, 0, 1, 1], [], []>} : vector<8x128xbf16>, vector<128x128xbf16>, vector<8x128xf32> -> vector<8x128xf32>
    %c0_10 = arith.constant 0 : index
    %c0_11 = arith.constant 0 : index
    %13 = vector.load %arg6[%c0_10, %c0_11] : memref<1x128xf32, #tpu.memory_space<vmem>>, vector<1x128xf32>
    %14 = vector.broadcast %13 : vector<1x128xf32> to vector<8x128xf32>
    %15 = arith.addf %12, %14 : vector<8x128xf32>
    %cst_12 = arith.constant 0.000000e+00 : f32
    %16 = vector.broadcast %cst_12 : f32 to vector<8x128xf32>
    %17 = arith.maximumf %15, %16 : vector<8x128xf32>
    %18 = arith.truncf %17 : vector<8x128xf32> to vector<8x128xbf16>
    %c0_13 = arith.constant 0 : index
    %c0_14 = arith.constant 0 : index
    %19 = vector.load %arg7[%c0_13, %c0_14] : memref<128x8xbf16, #tpu.memory_space<vmem>>, vector<128x8xbf16>
    %cst_15 = arith.constant dense<0.000000e+00> : vector<8x8xf32>
    %20 = tpu.matmul %18, %19, %cst_15 {dimension_numbers = #tpu.dot_dimension_numbers<[1], [0], [0], [1], [0, 0, 1, 1], [], []>} : vector<8x128xbf16>, vector<128x8xbf16>, vector<8x8xf32> -> vector<8x8xf32>
    %c0_16 = arith.constant 0 : index
    %c0_17 = arith.constant 0 : index
    %21 = vector.load %arg8[%c0_16, %c0_17] : memref<1x8xf32, #tpu.memory_space<vmem>>, vector<1x8xf32>
    %22 = vector.broadcast %21 : vector<1x8xf32> to vector<8x8xf32>
    %23 = arith.addf %20, %22 : vector<8x8xf32>
    %24 = math.tanh %23 : vector<8x8xf32>
    %25 = vector.broadcast %0 : f32 to vector<8x8xf32>
    %26 = arith.mulf %25, %24 : vector<8x8xf32>
    %c0_18 = arith.constant 0 : index
    %c0_19 = arith.constant 0 : index
    %27 = vector.load %arg9[%c0_18, %c0_19] : memref<8x8xf32, #tpu.memory_space<vmem>>, vector<8x8xf32>
    tpu.vector_store %arg9[%c0_18, %c0_19], %26 {strides = array<i32>} : memref<8x8xf32, #tpu.memory_space<vmem>>, vector<8x8xf32>,
    return
  }
  func.func @transform_0(%arg0: i32) -> i32 {
    %c0_i32 = arith.constant 0 : i32
    %c0_i32_0 = arith.constant 0 : i32
    return %c0_i32 : i32
  }
  func.func @transform_1(%arg0: i32) -> (i32, i32) {
    %c0_i32 = arith.constant 0 : i32
    %c0_i32_0 = arith.constant 0 : i32
    return %arg0, %c0_i32 : i32, i32
  }
  func.func @transform_2(%arg0: i32) -> (i32, i32) {
    %c0_i32 = arith.constant 0 : i32
    %c0_i32_0 = arith.constant 0 : i32
    %c0_i32_1 = arith.constant 0 : i32
    return %c0_i32, %c0_i32_0 : i32, i32
  }
  func.func @transform_3(%arg0: i32) -> (i32, i32) {
    %c0_i32 = arith.constant 0 : i32
    %c0_i32_0 = arith.constant 0 : i32
    %c0_i32_1 = arith.constant 0 : i32
    return %c0_i32, %c0_i32_0 : i32, i32
  }
  func.func @transform_4(%arg0: i32) -> (i32, i32) {
    %c0_i32 = arith.constant 0 : i32
    %c0_i32_0 = arith.constant 0 : i32
    %c0_i32_1 = arith.constant 0 : i32
    return %c0_i32, %c0_i32_0 : i32, i32
  }
  func.func @transform_5(%arg0: i32) -> (i32, i32) {
    %c0_i32 = arith.constant 0 : i32
    %c0_i32_0 = arith.constant 0 : i32
    %c0_i32_1 = arith.constant 0 : i32
    return %c0_i32, %c0_i32_0 : i32, i32
  }
  func.func @transform_6(%arg0: i32) -> (i32, i32) {
    %c0_i32 = arith.constant 0 : i32
    %c0_i32_0 = arith.constant 0 : i32
    %c0_i32_1 = arith.constant 0 : i32
    return %c0_i32, %c0_i32_0 : i32, i32
  }
  func.func @transform_7(%arg0: i32) -> (i32, i32) {
    %c0_i32 = arith.constant 0 : i32
    %c0_i32_0 = arith.constant 0 : i32
    %c0_i32_1 = arith.constant 0 : i32
    return %c0_i32, %c0_i32_0 : i32, i32
  }
  func.func @transform_8(%arg0: i32) -> (i32, i32) {
    %c0_i32 = arith.constant 0 : i32
    %c0_i32_0 = arith.constant 0 : i32
    return %arg0, %c0_i32 : i32, i32
  }
}

</mosaic_0001>

<llo_original>
// kernel: tpu_custom_call.1
$region0: #{tpu_custom_call.1}
  #allocation0 [shape = 'u32[]', space=smem, size = 0x4, offset = 0x4, fixed_abs, tag = 'smem constant byte address 0x4 - core index']
  #allocation1 [shape = 'u32[144,128]{1,0:T(1,128)}', space=vmem, size = 0x12000, scoped, tag = 'internal scratch']
  #allocation2 [shape = 'f32[1]{0:T(128)S(6)}', space=smem, size = 0x200, scoped, tag = 'scoped memory for tpu_custom_call.1']
  %s0 = inlined_call_operand.<no memory space> [shape: f32[1], index: 0, kind: input, shape index: {}]
  %s1 = inlined_call_operand.vmem [shape: f32[8,16], index: 1, kind: input, shape index: {}]
  %s2 = inlined_call_operand.hbm [shape: bf16[16,128], index: 2, kind: input, shape index: {}]
  %s3 = inlined_call_operand.vmem [shape: f32[1,128], index: 3, kind: input, shape index: {}]
  %s4 = inlined_call_operand.vmem [shape: bf16[128,128], index: 4, kind: input, shape index: {}]
  %s5 = inlined_call_operand.hbm [shape: f32[1,128], index: 5, kind: input, shape index: {}]
  %s6 = inlined_call_operand.vmem [shape: bf16[128,8], index: 6, kind: input, shape index: {}]
  %s7 = inlined_call_operand.vmem [shape: f32[1,8], index: 7, kind: input, shape index: {}]
  %s8 = inlined_call_operand.hbm [shape: f32[8,8], index: 8, kind: output, shape index: {}]
  %s9 = sld [smem:[#allocation0]]
  $region50: #{tpu_custom_call.1} parent=0
    _
  %s11 = ssub.s32 1, %s9
  %s12 = scalar_select 0, %s11, %s9
  %13 = sst [smem:[#allocation2]] %s0
  $region1: #{tpu_custom_call.1} parent=0
    #allocation3 [shape = 'u8[4096]{0}', space=vmem, size = 0x1000, scoped, tag = 'input window, operand 2, single buffered']
    #allocation4 [shape = 's32[1]{0}', space=sflag, size = 0x4, scoped, tag = 'scoped memory for tpu_custom_call.1']
    #allocation5 [shape = 's32[1]{0}', space=sflag, size = 0x4, scoped, tag = 'scoped memory for tpu_custom_call.1']
    #allocation6 [shape = 'u8[512]{0}', space=vmem, size = 0x400, scoped, tag = 'input window, operand 5, single buffered']
    #allocation7 [shape = 's32[1]{0}', space=sflag, size = 0x4, scoped, tag = 'scoped memory for tpu_custom_call.1']
    #allocation8 [shape = 'u8[4096]{0}', space=vmem, size = 0x1000, scoped, tag = 'output window, operand 0, single buffered']
    %14 = vsyncpa [#allocation4], 0
    %15 = vsyncpa [#allocation7], 0
    %16 = vsyncpa [#allocation5], 0
    // Predicated region
    $region2: #{tpu_custom_call.1} parent=1 // pred_check
      _
    $region3: #{tpu_custom_call.1} parent=1 // pred_check_branch
      %18 = sbr.rel (0) target = $region5
    $region4: #{tpu_custom_call.1} parent=1 // pred_region
      _
    $region5: #{tpu_custom_call.1} parent=1 // pred_fallthru
      _
    // Predicated region
    $region6: #{tpu_custom_call.1} parent=1 // pred_check
      _
    $region7: #{tpu_custom_call.1} parent=1 // pred_check_branch
      %20 = sbr.rel (0) target = $region9
    $region8: #{tpu_custom_call.1} parent=1 // pred_region
      _
    $region9: #{tpu_custom_call.1} parent=1 // pred_fallthru
      _
    // Predicated region
    $region10: #{tpu_custom_call.1} parent=1 // pred_check
      _
    $region11: #{tpu_custom_call.1} parent=1 // pred_check_branch
      %22 = sbr.rel (0) target = $region13
    $region12: #{tpu_custom_call.1} parent=1 // pred_region
      %s24 = ssub.s32 128, 128
      %25 = vsyncadd [#allocation4], %s24
      %s26 = sshll.u32 [#allocation3], 4
      %s27 = int_to_ptr.vmem [resolvable:$true] %s26
      %32 = dma.hbm_to_vmem [thread:$0]  %s2, 128, %s27, [#allocation4], 64, 64, 4
    $region13: #{tpu_custom_call.1} parent=1 // pred_fallthru
      _
    // Predicated region
    $region14: #{tpu_custom_call.1} parent=1 // pred_check
      _
    $region15: #{tpu_custom_call.1} parent=1 // pred_check_branch
      %34 = sbr.rel (0) target = $region17
    $region16: #{tpu_custom_call.1} parent=1 // pred_region
      _
    $region17: #{tpu_custom_call.1} parent=1 // pred_fallthru
      _
    // Predicated region
    $region18: #{tpu_custom_call.1} parent=1 // pred_check
      _
    $region19: #{tpu_custom_call.1} parent=1 // pred_check_branch
      %36 = sbr.rel (0) target = $region21
    $region20: #{tpu_custom_call.1} parent=1 // pred_region
      _
    $region21: #{tpu_custom_call.1} parent=1 // pred_fallthru
      _
    // Predicated region
    $region22: #{tpu_custom_call.1} parent=1 // pred_check
      _
    $region23: #{tpu_custom_call.1} parent=1 // pred_check_branch
      %38 = sbr.rel (0) target = $region25
    $region24: #{tpu_custom_call.1} parent=1 // pred_region
      %s40 = ssub.s32 16, 16
      %41 = vsyncadd [#allocation7], %s40
      %s43 = sshll.u32 [#allocation6], 4
      %s44 = int_to_ptr.vmem [resolvable:$true] %s43
      %46 = dma.hbm_to_vmem [thread:$0]  %s5, 16, %s44, [#allocation7]
    $region25: #{tpu_custom_call.1} parent=1 // pred_fallthru
      _
    // Predicated region
    $region26: #{tpu_custom_call.1} parent=1 // pred_check
      _
    $region27: #{tpu_custom_call.1} parent=1 // pred_check_branch
      %48 = sbr.rel (0) target = $region29
    $region28: #{tpu_custom_call.1} parent=1 // pred_region
      _
    $region29: #{tpu_custom_call.1} parent=1 // pred_fallthru
      _
    // Predicated region
    $region30: #{tpu_custom_call.1} parent=1 // pred_check
      _
    $region31: #{tpu_custom_call.1} parent=1 // pred_check_branch
      %50 = sbr.rel (0) target = $region33
    $region32: #{tpu_custom_call.1} parent=1 // pred_region
      _
    $region33: #{tpu_custom_call.1} parent=1 // pred_fallthru
      _
    // Predicated region
    $region34: #{tpu_custom_call.1} parent=1 // pred_check
      _
    $region35: #{tpu_custom_call.1} parent=1 // pred_check_branch
      %52 = sbr.rel (0) target = $region37
    $region36: #{tpu_custom_call.1} parent=1 // pred_region
      %53 = dma.done [#allocation4], 128
    $region37: #{tpu_custom_call.1} parent=1 // pred_fallthru
      _
    // Predicated region
    $region38: #{tpu_custom_call.1} parent=1 // pred_check
      _
    $region39: #{tpu_custom_call.1} parent=1 // pred_check_branch
      %55 = sbr.rel (0) target = $region41
    $region40: #{tpu_custom_call.1} parent=1 // pred_region
      %56 = dma.done [#allocation7], 16
    $region41: #{tpu_custom_call.1} parent=1 // pred_fallthru
      _
    %s58 = sld [smem:[#allocation2]]
    %v59 = vld [vmem:[%s1] sm:$0xff]
    %v60 = vpack.c.bf16 %v59, %v59
    %v61 = vld [vmem:[#allocation3] sm:$0xf]
    %v62 = vld [vmem:[#allocation3 + $0x4] sm:$0xf]
    %v63 = vld [vmem:[%s3] sm:$0x1]
    %v65 = vlaneseq
    %v66 = vshrl.u32 %v65, 7
    %v67 = vsub.s32 0, %v66
    %v68 = vrot.slane %v63, %v67
    %v72 = vunpack.c.l.b16 %v61
    %v73 = vunpack.c.l.b16 %v62
    %v74 = vpack.c.b16 %v73, %v72
    %vm76 = vcmask 130048
    %v78 = vsel %vm76, %v60, 0
    %80 = vmatprep.subr.bf16.mxu0 0
    %81 = vmatpush1.bf16.msra.mxu0 0
    %82 = vmatprep.subr.bf16.mxu0 0
    %83 = vmatpush1.bf16.msra.mxu0 0
    %84 = vmatprep.subr.bf16.mxu0 0
    %85 = vmatpush1.bf16.msra.mxu0 0
    %86 = vmatprep.subr.bf16.mxu0 0
    %87 = vmatpush1.bf16.msra.mxu0 0
    %88 = vmatprep.subr.bf16.mxu0 0
    %89 = vmatpush1.bf16.msra.mxu0 0
    %90 = vmatprep.subr.bf16.mxu0 0
    %91 = vmatpush1.bf16.msra.mxu0 0
    %92 = vmatprep.subr.bf16.mxu0 0
    %93 = vmatpush1.bf16.msra.mxu0 0
    %94 = vmatprep.subr.bf16.mxu0 0
    %95 = vmatpush1.bf16.msra.mxu0 %v74
    %96 = vmatprep.subr.bf16.mxu0 0
    %97 = vmatpush2.bf16.msra.mxu0 0
    %98 = vmatprep.subr.bf16.mxu0 0
    %99 = vmatpush2.bf16.msra.mxu0 0
    %100 = vmatprep.subr.bf16.mxu0 0
    %101 = vmatpush2.bf16.msra.mxu0 0
    %102 = vmatprep.subr.bf16.mxu0 0
    %103 = vmatpush2.bf16.msra.mxu0 0
    %104 = vmatprep.subr.bf16.mxu0 0
    %105 = vmatpush2.bf16.msra.mxu0 0
    %106 = vmatprep.subr.bf16.mxu0 0
    %107 = vmatpush2.bf16.msra.mxu0 0
    %108 = vmatprep.subr.bf16.mxu0 0
    %109 = vmatpush2.bf16.msra.mxu0 0
    %110 = vmatprep.subr.bf16.mxu0 0
    %111 = vmatpush2.bf16.msra.mxu0 0
    %112 = vmatprep.mubr.bf16.mxu0 0
    %113 = vmatmul.mubr.bf16.gmra.mxu0 %v78
    %v114 = vpop.f32.mrf.mxu0
    %v115 = vadd.f32 %v68, %v114
    %v116 = vpop.f32.mrf.mxu0
    %v117 = vpop.f32.mrf.mxu0
    %v118 = vpop.f32.mrf.mxu0
    %119 = vdwg.mxu0
    %v120 = vmax.f32 %v115, 0.0
    %v121 = vpack.c.bf16 %v120, %v120
    %v122 = vld [vmem:[%s4] sm:$0xf]
    %v123 = vld [vmem:[%s4 + $0x4] sm:$0xf]
    %v124 = vld [vmem:[%s4 + $0x8] sm:$0xf]
    %v125 = vld [vmem:[%s4 + $0xc] sm:$0xf]
    %v126 = vld [vmem:[%s4 + $0x10] sm:$0xf]
    %v127 = vld [vmem:[%s4 + $0x14] sm:$0xf]
    %v128 = vld [vmem:[%s4 + $0x18] sm:$0xf]
    %v129 = vld [vmem:[%s4 + $0x1c] sm:$0xf]
    %v130 = vld [vmem:[%s4 + $0x20] sm:$0xf]
    %v131 = vld [vmem:[%s4 + $0x24] sm:$0xf]
    %v132 = vld [vmem:[%s4 + $0x28] sm:$0xf]
    %v133 = vld [vmem:[%s4 + $0x2c] sm:$0xf]
    %v134 = vld [vmem:[%s4 + $0x30] sm:$0xf]
    %v135 = vld [vmem:[%s4 + $0x34] sm:$0xf]
    %v136 = vld [vmem:[%s4 + $0x38] sm:$0xf]
    %v137 = vld [vmem:[%s4 + $0x3c] sm:$0xf]
    %v138 = vld [vmem:[#allocation6] sm:$0x1]
    %v140 = vlaneseq
    %v141 = vshrl.u32 %v140, 7
    %v142 = vsub.s32 0, %v141
    %v143 = vrot.slane %v138, %v142
    %v161 = vunpack.c.l.b16 %v122
    %v162 = vunpack.c.l.b16 %v123
    %v163 = vunpack.c.l.b16 %v124
    %v164 = vunpack.c.l.b16 %v125
    %v165 = vunpack.c.l.b16 %v126
    %v166 = vunpack.c.l.b16 %v127
    %v167 = vunpack.c.l.b16 %v128
    %v168 = vunpack.c.l.b16 %v129
    %v169 = vunpack.c.l.b16 %v130
    %v170 = vunpack.c.l.b16 %v131
    %v171 = vunpack.c.l.b16 %v132
    %v172 = vunpack.c.l.b16 %v133
    %v173 = vunpack.c.l.b16 %v134
    %v174 = vunpack.c.l.b16 %v135
    %v175 = vunpack.c.l.b16 %v136
    %v176 = vunpack.c.l.b16 %v137
    %v177 = vpack.c.b16 %v162, %v161
    %v178 = vpack.c.b16 %v164, %v163
    %v179 = vpack.c.b16 %v166, %v165
    %v180 = vpack.c.b16 %v168, %v167
    %v181 = vpack.c.b16 %v170, %v169
    %v182 = vpack.c.b16 %v172, %v171
    %v183 = vpack.c.b16 %v174, %v173
    %v184 = vpack.c.b16 %v176, %v175
    %193 = vmatprep.subr.bf16.mxu0 0
    %194 = vmatpush1.bf16.msra.mxu0 %v184
    %195 = vmatprep.subr.bf16.mxu0 0
    %196 = vmatpush1.bf16.msra.mxu0 %v183
    %197 = vmatprep.subr.bf16.mxu0 0
    %198 = vmatpush1.bf16.msra.mxu0 %v182
    %199 = vmatprep.subr.bf16.mxu0 0
    %200 = vmatpush1.bf16.msra.mxu0 %v181
    %201 = vmatprep.subr.bf16.mxu0 0
    %202 = vmatpush1.bf16.msra.mxu0 %v180
    %203 = vmatprep.subr.bf16.mxu0 0
    %204 = vmatpush1.bf16.msra.mxu0 %v179
    %205 = vmatprep.subr.bf16.mxu0 0
    %206 = vmatpush1.bf16.msra.mxu0 %v178
    %207 = vmatprep.subr.bf16.mxu0 0
    %208 = vmatpush1.bf16.msra.mxu0 %v177
    %209 = vmatprep.subr.bf16.mxu0 0
    %210 = vmatpush2.bf16.msra.mxu0 0
    %211 = vmatprep.subr.bf16.mxu0 0
    %212 = vmatpush2.bf16.msra.mxu0 0
    %213 = vmatprep.subr.bf16.mxu0 0
    %214 = vmatpush2.bf16.msra.mxu0 0
    %215 = vmatprep.subr.bf16.mxu0 0
    %216 = vmatpush2.bf16.msra.mxu0 0
    %217 = vmatprep.subr.bf16.mxu0 0
    %218 = vmatpush2.bf16.msra.mxu0 0
    %219 = vmatprep.subr.bf16.mxu0 0
    %220 = vmatpush2.bf16.msra.mxu0 0
    %221 = vmatprep.subr.bf16.mxu0 0
    %222 = vmatpush2.bf16.msra.mxu0 0
    %223 = vmatprep.subr.bf16.mxu0 0
    %224 = vmatpush2.bf16.msra.mxu0 0
    %225 = vmatprep.mubr.bf16.mxu0 0
    %226 = vmatmul.mubr.bf16.gmra.mxu0 %v121
    %v227 = vpop.f32.mrf.mxu0
    %v228 = vadd.f32 %v143, %v227
    %v229 = vpop.f32.mrf.mxu0
    %v230 = vpop.f32.mrf.mxu0
    %v231 = vpop.f32.mrf.mxu0
    %232 = vdwg.mxu0
    %v233 = vmax.f32 %v228, 0.0
    %v234 = vpack.c.bf16 %v233, %v233
    %v235 = vld [vmem:[%s6] sm:$0xf]
    %v236 = vld [vmem:[%s6 + $0x4] sm:$0xf]
    %v237 = vld [vmem:[%s6 + $0x8] sm:$0xf]
    %v238 = vld [vmem:[%s6 + $0xc] sm:$0xf]
    %v239 = vld [vmem:[%s6 + $0x10] sm:$0xf]
    %v240 = vld [vmem:[%s6 + $0x14] sm:$0xf]
    %v241 = vld [vmem:[%s6 + $0x18] sm:$0xf]
    %v242 = vld [vmem:[%s6 + $0x1c] sm:$0xf]
    %v243 = vld [vmem:[%s6 + $0x20] sm:$0xf]
    %v244 = vld [vmem:[%s6 + $0x24] sm:$0xf]
    %v245 = vld [vmem:[%s6 + $0x28] sm:$0xf]
    %v246 = vld [vmem:[%s6 + $0x2c] sm:$0xf]
    %v247 = vld [vmem:[%s6 + $0x30] sm:$0xf]
    %v248 = vld [vmem:[%s6 + $0x34] sm:$0xf]
    %v249 = vld [vmem:[%s6 + $0x38] sm:$0xf]
    %v250 = vld [vmem:[%s6 + $0x3c] sm:$0xf]
    %v251 = vld [vmem:[%s7] sm:$0x1]
    %v253 = vlaneseq
    %v254 = vshrl.u32 %v253, 7
    %v255 = vsub.s32 0, %v254
    %v256 = vrot.slane %v251, %v255
    %v274 = vunpack.c.l.b16 %v235
    %v275 = vunpack.c.l.b16 %v236
    %v276 = vunpack.c.l.b16 %v237
    %v277 = vunpack.c.l.b16 %v238
    %v278 = vunpack.c.l.b16 %v239
    %v279 = vunpack.c.l.b16 %v240
    %v280 = vunpack.c.l.b16 %v241
    %v281 = vunpack.c.l.b16 %v242
    %v282 = vunpack.c.l.b16 %v243
    %v283 = vunpack.c.l.b16 %v244
    %v284 = vunpack.c.l.b16 %v245
    %v285 = vunpack.c.l.b16 %v246
    %v286 = vunpack.c.l.b16 %v247
    %v287 = vunpack.c.l.b16 %v248
    %v288 = vunpack.c.l.b16 %v249
    %v289 = vunpack.c.l.b16 %v250
    %v290 = vpack.c.b16 %v275, %v274
    %v291 = vpack.c.b16 %v277, %v276
    %v292 = vpack.c.b16 %v279, %v278
    %v293 = vpack.c.b16 %v281, %v280
    %v294 = vpack.c.b16 %v283, %v282
    %v295 = vpack.c.b16 %v285, %v284
    %v296 = vpack.c.b16 %v287, %v286
    %v297 = vpack.c.b16 %v289, %v288
    %306 = vmatprep.subr.bf16.mxu0 0
    %307 = vmatpush1.bf16.msra.mxu0 %v297
    %308 = vmatprep.subr.bf16.mxu0 0
    %309 = vmatpush1.bf16.msra.mxu0 %v296
    %310 = vmatprep.subr.bf16.mxu0 0
    %311 = vmatpush1.bf16.msra.mxu0 %v295
    %312 = vmatprep.subr.bf16.mxu0 0
    %313 = vmatpush1.bf16.msra.mxu0 %v294
    %314 = vmatprep.subr.bf16.mxu0 0
    %315 = vmatpush1.bf16.msra.mxu0 %v293
    %316 = vmatprep.subr.bf16.mxu0 0
    %317 = vmatpush1.bf16.msra.mxu0 %v292
    %318 = vmatprep.subr.bf16.mxu0 0
    %319 = vmatpush1.bf16.msra.mxu0 %v291
    %320 = vmatprep.subr.bf16.mxu0 0
    %321 = vmatpush1.bf16.msra.mxu0 %v290
    %322 = vmatprep.subr.bf16.mxu0 0
    %323 = vmatpush2.bf16.msra.mxu0 0
    %324 = vmatprep.subr.bf16.mxu0 0
    %325 = vmatpush2.bf16.msra.mxu0 0
    %326 = vmatprep.subr.bf16.mxu0 0
    %327 = vmatpush2.bf16.msra.mxu0 0
    %328 = vmatprep.subr.bf16.mxu0 0
    %329 = vmatpush2.bf16.msra.mxu0 0
    %330 = vmatprep.subr.bf16.mxu0 0
    %331 = vmatpush2.bf16.msra.mxu0 0
    %332 = vmatprep.subr.bf16.mxu0 0
    %333 = vmatpush2.bf16.msra.mxu0 0
    %334 = vmatprep.subr.bf16.mxu0 0
    %335 = vmatpush2.bf16.msra.mxu0 0
    %336 = vmatprep.subr.bf16.mxu0 0
    %337 = vmatpush2.bf16.msra.mxu0 0
    %338 = vmatprep.mubr.bf16.mxu0 0
    %339 = vmatmul.mubr.bf16.gmra.mxu0 %v234
    %v340 = vpop.f32.mrf.mxu0
    %v341 = vadd.f32 %v256, %v340
    %v342 = vpop.f32.mrf.mxu0
    %v343 = vpop.f32.mrf.mxu0
    %v344 = vpop.f32.mrf.mxu0
    %345 = vdwg.mxu0
    %v346 = vtanh.pop %v341
    %v347 = vstv %s58
    %v348 = vmul.f32 %v347, %v346
    %vm349 = vcmask 64512
    %350 = vst.msk [vmem:[#allocation8] sm:$0xff] %vm349, %v348
    // Predicated region
    $region42: #{tpu_custom_call.1} parent=1 // pred_check
      _
    $region43: #{tpu_custom_call.1} parent=1 // pred_check_branch
      %352 = sbr.rel (0) target = $region45
    $region44: #{tpu_custom_call.1} parent=1 // pred_region
      %s354 = ssub.s32 128, 128
      %355 = vsyncadd [#allocation5], %s354
      %s357 = sshll.u32 [#allocation8], 4
      %s358 = int_to_ptr.vmem [resolvable:$true] %s357
      %360 = dma.vmem_to_hbm [thread:$0]  %s358, 128, %s8, [#allocation5]
    $region45: #{tpu_custom_call.1} parent=1 // pred_fallthru
      _
    // Predicated region
    $region46: #{tpu_custom_call.1} parent=1 // pred_check
      _
    $region47: #{tpu_custom_call.1} parent=1 // pred_check_branch
      %362 = sbr.rel (0) target = $region49
    $region48: #{tpu_custom_call.1} parent=1 // pred_region
      %363 = dma.done [#allocation5], 128
    $region49: #{tpu_custom_call.1} parent=1 // pred_fallthru
      _
    %364 = vsyncpa [#allocation4], 1
    %365 = vsyncpa [#allocation7], 1
    %366 = vsyncpa [#allocation5], 1

</llo_original>
